<compile_context>
chip_gen: v7x
topology: tpu7x:2x2x1
jax: 0.10.0
libtpu: 0.0.40
codegen_flags: <defaults>
</compile_context>

<pallas_src>
import jax
import jax.numpy as jnp
from jax import lax
from jax.experimental import pallas as pl
from jax.experimental.pallas import tpu as pltpu

ALPHA = 0.2
BETA = 0.2
EPS = 1e-6

_LANE = 128                    # vreg lane width
_SUB = 512                     # columns per inner fori_loop iteration (4 lane slices)
_IN_VMEM_BUDGET = 24 << 20     # 4 inputs x 2 pipeline buffers budget (fits v7x VMEM)


def _pick_t_tile(B, T, t_tile):
    """Pick a lane/sub-chunk aligned time tile from the VMEM budget."""
    if t_tile is None:
        t_tile = _IN_VMEM_BUDGET // (4 * 2 * B * 4)   # 4 arrays x 2 buffers x f32
    t_tile = max(_SUB, (int(t_tile) // _SUB) * _SUB)
    if T >= _SUB:
        # Prefer blocks that do not exceed the array extent (standard padded
        # last block); only tiny T < _SUB uses a single block wider than T.
        t_tile = min(t_tile, (T // _SUB) * _SUB)
    return t_tile


def si_sdr_loss(short, middle, long_, target, mix_lengths, *, t_tile=None):
    """Pallas implementation of SISDRLoss.forward. Returns a scalar loss."""
    B, T = short.shape
    t_tile = _pick_t_tile(B, T, t_tile)
    num_tiles = pl.cdiv(T, t_tile)
    n_sub = t_tile // _SUB
    needs_t_guard = (T % t_tile) != 0          # last block padded by Pallas?

    # Clamp lengths to T so block padding can never leak through the pred mask.
    lens2d = jnp.minimum(mix_lengths.astype(jnp.int32), T).reshape(B, 1)

    def kernel(len_ref, short_ref, middle_ref, long_ref, target_ref, out_ref,
               pt_ref, pp_ref, tt_ref):
        k = pl.program_id(0)

        @pl.when(k == 0)
        def _init():
            pt_ref[...] = jnp.zeros_like(pt_ref)
            pp_ref[...] = jnp.zeros_like(pp_ref)
            tt_ref[...] = jnp.zeros_like(tt_ref)

        # Hoisted per-tile constants (JAX does not CSE broadcasts in loops).
        lane_iota = lax.broadcasted_iota(jnp.int32, (B, _LANE), 1)
        idx0 = k * t_tile + lane_iota                           # (B, LANE)
        lens = jnp.broadcast_to(len_ref[...], (B, _LANE))       # (B, LANE)

        def sub_body(ci, carry):
            pt0, pp0, pt1, pp1, pt2, pp2, tt = carry
            base = ci * _SUB
            for s in range(_SUB // _LANE):                      # static unroll
                off = pl.multiple_of(base + s * _LANE, _LANE)
                idx = idx0 + off                                # global time index
                mask = idx < lens                               # mask_sequences(pred, ...)

                t = target_ref[:, pl.ds(off, _LANE)].astype(jnp.float32)
                if needs_t_guard:
                    # Padded last block: bound the (unmasked) target by T. The
                    # pred mask already implies idx < T because lens <= T.
                    t = jnp.where(idx < T, t, 0.0)
                tt = tt + t * t

                p0 = jnp.where(
                    mask, short_ref[:, pl.ds(off, _LANE)].astype(jnp.float32), 0.0)
                pt0 = pt0 + p0 * t
                pp0 = pp0 + p0 * p0

                p1 = jnp.where(
                    mask, middle_ref[:, pl.ds(off, _LANE)].astype(jnp.float32), 0.0)
                pt1 = pt1 + p1 * t
                pp1 = pp1 + p1 * p1

                p2 = jnp.where(
                    mask, long_ref[:, pl.ds(off, _LANE)].astype(jnp.float32), 0.0)
                pt2 = pt2 + p2 * t
                pp2 = pp2 + p2 * p2
            return pt0, pp0, pt1, pp1, pt2, pp2, tt

        carry0 = (pt_ref[0], pp_ref[0], pt_ref[1], pp_ref[1],
                  pt_ref[2], pp_ref[2], tt_ref[...])
        pt0, pp0, pt1, pp1, pt2, pp2, tt = lax.fori_loop(0, n_sub, sub_body, carry0)
        pt_ref[0] = pt0
        pp_ref[0] = pp0
        pt_ref[1] = pt1
        pp_ref[1] = pp1
        pt_ref[2] = pt2
        pp_ref[2] = pp2
        tt_ref[...] = tt

        @pl.when(k == pl.num_programs(0) - 1)
        def _finalize():
            # Single deferred cross-lane reduce per accumulator.
            tt_s = jnp.sum(tt_ref[...], axis=-1, keepdims=True)   # (B, 1)

            def sdr_sum(i):
                pt = jnp.sum(pt_ref[i], axis=-1, keepdims=True)
                pp = jnp.sum(pp_ref[i], axis=-1, keepdims=True)
                a = (pt + EPS) / (tt_s + EPS)
                a_tt = a * tt_s
                num = a * a_tt + EPS                               # sum(ts^2) + eps
                # Expanded residual; clamp against catastrophic cancellation at
                # very high SI-SDR so log10 never sees a non-positive value.
                den = jnp.maximum(a * a_tt - 2.0 * a * pt + pp + EPS, EPS)
                return jnp.sum(20.0 * jnp.log10(num / den))        # scalar

            total = ((1.0 - ALPHA - BETA) * sdr_sum(0)
                     + ALPHA * sdr_sum(1)
                     + BETA * sdr_sum(2))
            out_ref[0, 0] = -total / jnp.float32(B)

    tile_spec = pl.BlockSpec((B, t_tile), lambda k: (0, k))
    in_buf_bytes = 4 * 2 * B * t_tile * 4
    vmem_limit = int(max(32 << 20, in_buf_bytes + (8 << 20)))

    out = pl.pallas_call(
        kernel,
        out_shape=jax.ShapeDtypeStruct((1, 1), jnp.float32),
        grid=(num_tiles,),
        in_specs=[
            # mix_lengths: tiny, fully resident in VMEM across the grid.
            pl.BlockSpec(memory_space=pltpu.MemorySpace.VMEM),
            tile_spec,  # short
            tile_spec,  # middle
            tile_spec,  # long
            tile_spec,  # target
        ],
        out_specs=pl.BlockSpec(memory_space=pltpu.MemorySpace.SMEM),
        scratch_shapes=[
            pltpu.VMEM((3, B, _LANE), jnp.float32),   # pt per scale (lane-dense)
            pltpu.VMEM((3, B, _LANE), jnp.float32),   # pp per scale (lane-dense)
            pltpu.VMEM((B, _LANE), jnp.float32),      # tt (lane-dense)
        ],
        compiler_params=pltpu.CompilerParams(
            dimension_semantics=("arbitrary",),       # reduction over time tiles
            vmem_limit_bytes=vmem_limit,
        ),
        cost_estimate=pl.CostEstimate(
            flops=14 * B * T,
            transcendentals=3 * B,
            bytes_accessed=4 * B * T * 4,
        ),
    )(lens2d, short, middle, long_, target)
    return out[0, 0]


def _si_sdr_loss_ref(short, middle, long_, target, mix_lengths):
    """Pure-JAX reference mirroring the PyTorch module."""
    B, T = short.shape
    mask = (jnp.arange(T)[None, :] < mix_lengths[:, None]).astype(jnp.float32)

    def si_sdr(pred, tgt, eps=EPS):
        a = (jnp.sum(pred * tgt, axis=-1, keepdims=True) + eps) / (
            jnp.sum(tgt ** 2, axis=-1, keepdims=True) + eps)
        ts = a * tgt
        val = (jnp.sum(ts ** 2, axis=-1) + eps) / (
            jnp.sum((ts - pred) ** 2, axis=-1) + eps)
        return 20.0 * jnp.log10(val)

    sdr_s = jnp.sum(si_sdr(short * mask, target))
    sdr_m = jnp.sum(si_sdr(middle * mask, target))
    sdr_l = jnp.sum(si_sdr(long_ * mask, target))
    return -((1.0 - ALPHA - BETA) * sdr_s + ALPHA * sdr_m + BETA * sdr_l) / B


if __name__ == "__main__":
    key = jax.random.PRNGKey(0)

    def run_case(B, T, lengths, t_tile):
        ks = jax.random.split(jax.random.fold_in(key, T), 4)
        short = jax.random.normal(ks[0], (B, T), dtype=jnp.float32)
        middle = jax.random.normal(ks[1], (B, T), dtype=jnp.float32)
        long_ = jax.random.normal(ks[2], (B, T), dtype=jnp.float32)
        target = jax.random.normal(ks[3], (B, T), dtype=jnp.float32)
        mix_lengths = jnp.asarray(lengths, dtype=jnp.int32)

        loss = jax.block_until_ready(
            si_sdr_loss(short, middle, long_, target, mix_lengths, t_tile=t_tile))
        ref = jax.block_until_ready(
            _si_sdr_loss_ref(short, middle, long_, target, mix_lengths))

        assert jnp.isfinite(loss), "kernel produced non-finite loss"
        assert jnp.allclose(loss, ref, rtol=1e-4, atol=1e-4), (loss, ref)

    # Auto tile: T=1000 -> t_tile=512, grid=2, padded last tile + per-row mask.
    run_case(4, 1000, [1000, 800, 512, 250], None)
    # Exactly divisible T (no target guard path), 4-step reduction grid.
    run_case(4, 2048, [2048, 1500, 1024, 300], 512)

    print("KERNEL_OK")
</pallas_src>

<mosaic_0001>
module attributes {stable_mosaic.version = 11 : i64} {
  func.func @kernel(%arg0: i32, %arg1: memref<4x1xi32, #tpu.memory_space<vmem>>, %arg2: memref<4x512xf32, #tpu.memory_space<vmem>>, %arg3: memref<4x512xf32, #tpu.memory_space<vmem>>, %arg4: memref<4x512xf32, #tpu.memory_space<vmem>>, %arg5: memref<4x512xf32, #tpu.memory_space<vmem>>, %arg6: memref<1x1xf32, #tpu.memory_space<smem>>, %arg7: memref<3x4x128xf32, #tpu.memory_space<vmem>>, %arg8: memref<3x4x128xf32, #tpu.memory_space<vmem>>, %arg9: memref<4x128xf32, #tpu.memory_space<vmem>>) attributes {dimension_semantics = [#tpu.dimension_semantics<arbitrary>], iteration_bounds = array<i64: 2>, scalar_prefetch = 0 : i64, scratch_operands = 3 : i64, tpu.core_type = #tpu.core_type<tc>, window_params = [{pipeline_mode = #tpu.pipeline_mode<synchronous>, transform_indices = @transform_0, window_bounds = array<i64: 4, 1>}, {transform_indices = @transform_1, window_bounds = array<i64: 4, 512>}, {transform_indices = @transform_2, window_bounds = array<i64: 4, 512>}, {transform_indices = @transform_3, window_bounds = array<i64: 4, 512>}, {transform_indices = @transform_4, window_bounds = array<i64: 4, 512>}, {transform_indices = @transform_5, window_bounds = array<i64: 1, 1>}]} {
    %c0_i32 = arith.constant 0 : i32
    %0 = arith.cmpi eq, %arg0, %c0_i32 : i32
    %1 = arith.extui %0 : i1 to i32
    %c0_i32_0 = arith.constant 0 : i32
    %2 = arith.cmpi ne, %1, %c0_i32_0 : i32
    scf.if %2 {
      %cst_79 = arith.constant 0.000000e+00 : f32
      %194 = vector.broadcast %cst_79 : f32 to vector<3x4x128xf32>
      %c0_80 = arith.constant 0 : index
      %c0_81 = arith.constant 0 : index
      %c0_82 = arith.constant 0 : index
      %195 = vector.load %arg7[%c0_80, %c0_81, %c0_82] : memref<3x4x128xf32, #tpu.memory_space<vmem>>, vector<3x4x128xf32>
      tpu.vector_store %arg7[%c0_80, %c0_81, %c0_82], %194 {strides = array<i32>} : memref<3x4x128xf32, #tpu.memory_space<vmem>>, vector<3x4x128xf32>,
      %cst_83 = arith.constant 0.000000e+00 : f32
      %196 = vector.broadcast %cst_83 : f32 to vector<3x4x128xf32>
      %c0_84 = arith.constant 0 : index
      %c0_85 = arith.constant 0 : index
      %c0_86 = arith.constant 0 : index
      %197 = vector.load %arg8[%c0_84, %c0_85, %c0_86] : memref<3x4x128xf32, #tpu.memory_space<vmem>>, vector<3x4x128xf32>
      tpu.vector_store %arg8[%c0_84, %c0_85, %c0_86], %196 {strides = array<i32>} : memref<3x4x128xf32, #tpu.memory_space<vmem>>, vector<3x4x128xf32>,
      %cst_87 = arith.constant 0.000000e+00 : f32
      %198 = vector.broadcast %cst_87 : f32 to vector<4x128xf32>
      %c0_88 = arith.constant 0 : index
      %c0_89 = arith.constant 0 : index
      %199 = vector.load %arg9[%c0_88, %c0_89] : memref<4x128xf32, #tpu.memory_space<vmem>>, vector<4x128xf32>
      tpu.vector_store %arg9[%c0_88, %c0_89], %198 {strides = array<i32>} : memref<4x128xf32, #tpu.memory_space<vmem>>, vector<4x128xf32>,
    } else {
    }
    %3 = tpu.iota {dimensions = array<i32: 1>} : vector<4x128xi32>
    %c512_i32 = arith.constant 512 : i32
    %4 = arith.muli %arg0, %c512_i32 : i32
    %5 = vector.broadcast %4 : i32 to vector<4x128xi32>
    %6 = arith.addi %5, %3 : vector<4x128xi32>
    %c0 = arith.constant 0 : index
    %c0_1 = arith.constant 0 : index
    %7 = vector.load %arg1[%c0, %c0_1] : memref<4x1xi32, #tpu.memory_space<vmem>>, vector<4x1xi32>
    %8 = vector.shape_cast %7 : vector<4x1xi32> to vector<4x1xi32>
    %9 = vector.broadcast %8 : vector<4x1xi32> to vector<4x128xi32>
    %c0_2 = arith.constant 0 : index
    %c0_3 = arith.constant 0 : index
    %c0_4 = arith.constant 0 : index
    %10 = vector.load %arg7[%c0_2, %c0_3, %c0_4] : memref<3x4x128xf32, #tpu.memory_space<vmem>>, vector<1x4x128xf32>
    %11 = vector.shape_cast %10 : vector<1x4x128xf32> to vector<4x128xf32>
    %c0_5 = arith.constant 0 : index
    %c0_6 = arith.constant 0 : index
    %c0_7 = arith.constant 0 : index
    %12 = vector.load %arg8[%c0_5, %c0_6, %c0_7] : memref<3x4x128xf32, #tpu.memory_space<vmem>>, vector<1x4x128xf32>
    %13 = vector.shape_cast %12 : vector<1x4x128xf32> to vector<4x128xf32>
    %c1 = arith.constant 1 : index
    %c0_8 = arith.constant 0 : index
    %c0_9 = arith.constant 0 : index
    %14 = vector.load %arg7[%c1, %c0_8, %c0_9] : memref<3x4x128xf32, #tpu.memory_space<vmem>>, vector<1x4x128xf32>
    %15 = vector.shape_cast %14 : vector<1x4x128xf32> to vector<4x128xf32>
    %c1_10 = arith.constant 1 : index
    %c0_11 = arith.constant 0 : index
    %c0_12 = arith.constant 0 : index
    %16 = vector.load %arg8[%c1_10, %c0_11, %c0_12] : memref<3x4x128xf32, #tpu.memory_space<vmem>>, vector<1x4x128xf32>
    %17 = vector.shape_cast %16 : vector<1x4x128xf32> to vector<4x128xf32>
    %c2 = arith.constant 2 : index
    %c0_13 = arith.constant 0 : index
    %c0_14 = arith.constant 0 : index
    %18 = vector.load %arg7[%c2, %c0_13, %c0_14] : memref<3x4x128xf32, #tpu.memory_space<vmem>>, vector<1x4x128xf32>
    %19 = vector.shape_cast %18 : vector<1x4x128xf32> to vector<4x128xf32>
    %c2_15 = arith.constant 2 : index
    %c0_16 = arith.constant 0 : index
    %c0_17 = arith.constant 0 : index
    %20 = vector.load %arg8[%c2_15, %c0_16, %c0_17] : memref<3x4x128xf32, #tpu.memory_space<vmem>>, vector<1x4x128xf32>
    %21 = vector.shape_cast %20 : vector<1x4x128xf32> to vector<4x128xf32>
    %c0_18 = arith.constant 0 : index
    %c0_19 = arith.constant 0 : index
    %22 = vector.load %arg9[%c0_18, %c0_19] : memref<4x128xf32, #tpu.memory_space<vmem>>, vector<4x128xf32>
    %c0_i32_20 = arith.constant 0 : i32
    %c512_i32_21 = arith.constant 512 : i32
    %23 = arith.muli %c0_i32_20, %c512_i32_21 : i32
    %c0_i32_22 = arith.constant 0 : i32
    %24 = arith.addi %23, %c0_i32_22 : i32
    %25 = tpu.assume_multiple %24, 128 : i32
    %26 = vector.broadcast %25 : i32 to vector<4x128xi32>
    %27 = arith.addi %6, %26 : vector<4x128xi32>
    %28 = arith.cmpi slt, %27, %9 : vector<4x128xi32>
    %c0_23 = arith.constant 0 : index
    %29 = arith.index_cast %25 : i32 to index
    %30 = vector.load %arg5[%c0_23, %29] : memref<4x512xf32, #tpu.memory_space<vmem>>, vector<4x128xf32>
    %c1000_i32 = arith.constant 1000 : i32
    %31 = vector.broadcast %c1000_i32 : i32 to vector<4x128xi32>
    %32 = arith.cmpi slt, %27, %31 : vector<4x128xi32>
    %cst = arith.constant 0.000000e+00 : f32
    %33 = vector.broadcast %cst : f32 to vector<4x128xf32>
    %34 = arith.select %32, %30, %33 : vector<4x128xi1>, vector<4x128xf32>
    %35 = arith.mulf %34, %34 : vector<4x128xf32>
    %36 = arith.addf %22, %35 : vector<4x128xf32>
    %c0_24 = arith.constant 0 : index
    %37 = arith.index_cast %25 : i32 to index
    %38 = vector.load %arg2[%c0_24, %37] : memref<4x512xf32, #tpu.memory_space<vmem>>, vector<4x128xf32>
    %cst_25 = arith.constant 0.000000e+00 : f32
    %39 = vector.broadcast %cst_25 : f32 to vector<4x128xf32>
    %40 = arith.select %28, %38, %39 : vector<4x128xi1>, vector<4x128xf32>
    %41 = arith.mulf %40, %34 : vector<4x128xf32>
    %42 = arith.addf %11, %41 : vector<4x128xf32>
    %43 = arith.mulf %40, %40 : vector<4x128xf32>
    %44 = arith.addf %13, %43 : vector<4x128xf32>
    %c0_26 = arith.constant 0 : index
    %45 = arith.index_cast %25 : i32 to index
    %46 = vector.load %arg3[%c0_26, %45] : memref<4x512xf32, #tpu.memory_space<vmem>>, vector<4x128xf32>
    %cst_27 = arith.constant 0.000000e+00 : f32
    %47 = vector.broadcast %cst_27 : f32 to vector<4x128xf32>
    %48 = arith.select %28, %46, %47 : vector<4x128xi1>, vector<4x128xf32>
    %49 = arith.mulf %48, %34 : vector<4x128xf32>
    %50 = arith.addf %15, %49 : vector<4x128xf32>
    %51 = arith.mulf %48, %48 : vector<4x128xf32>
    %52 = arith.addf %17, %51 : vector<4x128xf32>
    %c0_28 = arith.constant 0 : index
    %53 = arith.index_cast %25 : i32 to index
    %54 = vector.load %arg4[%c0_28, %53] : memref<4x512xf32, #tpu.memory_space<vmem>>, vector<4x128xf32>
    %cst_29 = arith.constant 0.000000e+00 : f32
    %55 = vector.broadcast %cst_29 : f32 to vector<4x128xf32>
    %56 = arith.select %28, %54, %55 : vector<4x128xi1>, vector<4x128xf32>
    %57 = arith.mulf %56, %34 : vector<4x128xf32>
    %58 = arith.addf %19, %57 : vector<4x128xf32>
    %59 = arith.mulf %56, %56 : vector<4x128xf32>
    %60 = arith.addf %21, %59 : vector<4x128xf32>
    %c128_i32 = arith.constant 128 : i32
    %61 = arith.addi %23, %c128_i32 : i32
    %62 = tpu.assume_multiple %61, 128 : i32
    %63 = vector.broadcast %62 : i32 to vector<4x128xi32>
    %64 = arith.addi %6, %63 : vector<4x128xi32>
    %65 = arith.cmpi slt, %64, %9 : vector<4x128xi32>
    %c0_30 = arith.constant 0 : index
    %66 = arith.index_cast %62 : i32 to index
    %67 = vector.load %arg5[%c0_30, %66] : memref<4x512xf32, #tpu.memory_space<vmem>>, vector<4x128xf32>
    %c1000_i32_31 = arith.constant 1000 : i32
    %68 = vector.broadcast %c1000_i32_31 : i32 to vector<4x128xi32>
    %69 = arith.cmpi slt, %64, %68 : vector<4x128xi32>
    %cst_32 = arith.constant 0.000000e+00 : f32
    %70 = vector.broadcast %cst_32 : f32 to vector<4x128xf32>
    %71 = arith.select %69, %67, %70 : vector<4x128xi1>, vector<4x128xf32>
    %72 = arith.mulf %71, %71 : vector<4x128xf32>
    %73 = arith.addf %36, %72 : vector<4x128xf32>
    %c0_33 = arith.constant 0 : index
    %74 = arith.index_cast %62 : i32 to index
    %75 = vector.load %arg2[%c0_33, %74] : memref<4x512xf32, #tpu.memory_space<vmem>>, vector<4x128xf32>
    %cst_34 = arith.constant 0.000000e+00 : f32
    %76 = vector.broadcast %cst_34 : f32 to vector<4x128xf32>
    %77 = arith.select %65, %75, %76 : vector<4x128xi1>, vector<4x128xf32>
    %78 = arith.mulf %77, %71 : vector<4x128xf32>
    %79 = arith.addf %42, %78 : vector<4x128xf32>
    %80 = arith.mulf %77, %77 : vector<4x128xf32>
    %81 = arith.addf %44, %80 : vector<4x128xf32>
    %c0_35 = arith.constant 0 : index
    %82 = arith.index_cast %62 : i32 to index
    %83 = vector.load %arg3[%c0_35, %82] : memref<4x512xf32, #tpu.memory_space<vmem>>, vector<4x128xf32>
    %cst_36 = arith.constant 0.000000e+00 : f32
    %84 = vector.broadcast %cst_36 : f32 to vector<4x128xf32>
    %85 = arith.select %65, %83, %84 : vector<4x128xi1>, vector<4x128xf32>
    %86 = arith.mulf %85, %71 : vector<4x128xf32>
    %87 = arith.addf %50, %86 : vector<4x128xf32>
    %88 = arith.mulf %85, %85 : vector<4x128xf32>
    %89 = arith.addf %52, %88 : vector<4x128xf32>
    %c0_37 = arith.constant 0 : index
    %90 = arith.index_cast %62 : i32 to index
    %91 = vector.load %arg4[%c0_37, %90] : memref<4x512xf32, #tpu.memory_space<vmem>>, vector<4x128xf32>
    %cst_38 = arith.constant 0.000000e+00 : f32
    %92 = vector.broadcast %cst_38 : f32 to vector<4x128xf32>
    %93 = arith.select %65, %91, %92 : vector<4x128xi1>, vector<4x128xf32>
    %94 = arith.mulf %93, %71 : vector<4x128xf32>
    %95 = arith.addf %58, %94 : vector<4x128xf32>
    %96 = arith.mulf %93, %93 : vector<4x128xf32>
    %97 = arith.addf %60, %96 : vector<4x128xf32>
    %c256_i32 = arith.constant 256 : i32
    %98 = arith.addi %23, %c256_i32 : i32
    %99 = tpu.assume_multiple %98, 128 : i32
    %100 = vector.broadcast %99 : i32 to vector<4x128xi32>
    %101 = arith.addi %6, %100 : vector<4x128xi32>
    %102 = arith.cmpi slt, %101, %9 : vector<4x128xi32>
    %c0_39 = arith.constant 0 : index
    %103 = arith.index_cast %99 : i32 to index
    %104 = vector.load %arg5[%c0_39, %103] : memref<4x512xf32, #tpu.memory_space<vmem>>, vector<4x128xf32>
    %c1000_i32_40 = arith.constant 1000 : i32
    %105 = vector.broadcast %c1000_i32_40 : i32 to vector<4x128xi32>
    %106 = arith.cmpi slt, %101, %105 : vector<4x128xi32>
    %cst_41 = arith.constant 0.000000e+00 : f32
    %107 = vector.broadcast %cst_41 : f32 to vector<4x128xf32>
    %108 = arith.select %106, %104, %107 : vector<4x128xi1>, vector<4x128xf32>
    %109 = arith.mulf %108, %108 : vector<4x128xf32>
    %110 = arith.addf %73, %109 : vector<4x128xf32>
    %c0_42 = arith.constant 0 : index
    %111 = arith.index_cast %99 : i32 to index
    %112 = vector.load %arg2[%c0_42, %111] : memref<4x512xf32, #tpu.memory_space<vmem>>, vector<4x128xf32>
    %cst_43 = arith.constant 0.000000e+00 : f32
    %113 = vector.broadcast %cst_43 : f32 to vector<4x128xf32>
    %114 = arith.select %102, %112, %113 : vector<4x128xi1>, vector<4x128xf32>
    %115 = arith.mulf %114, %108 : vector<4x128xf32>
    %116 = arith.addf %79, %115 : vector<4x128xf32>
    %117 = arith.mulf %114, %114 : vector<4x128xf32>
    %118 = arith.addf %81, %117 : vector<4x128xf32>
    %c0_44 = arith.constant 0 : index
    %119 = arith.index_cast %99 : i32 to index
    %120 = vector.load %arg3[%c0_44, %119] : memref<4x512xf32, #tpu.memory_space<vmem>>, vector<4x128xf32>
    %cst_45 = arith.constant 0.000000e+00 : f32
    %121 = vector.broadcast %cst_45 : f32 to vector<4x128xf32>
    %122 = arith.select %102, %120, %121 : vector<4x128xi1>, vector<4x128xf32>
    %123 = arith.mulf %122, %108 : vector<4x128xf32>
    %124 = arith.addf %87, %123 : vector<4x128xf32>
    %125 = arith.mulf %122, %122 : vector<4x128xf32>
    %126 = arith.addf %89, %125 : vector<4x128xf32>
    %c0_46 = arith.constant 0 : index
    %127 = arith.index_cast %99 : i32 to index
    %128 = vector.load %arg4[%c0_46, %127] : memref<4x512xf32, #tpu.memory_space<vmem>>, vector<4x128xf32>
    %cst_47 = arith.constant 0.000000e+00 : f32
    %129 = vector.broadcast %cst_47 : f32 to vector<4x128xf32>
    %130 = arith.select %102, %128, %129 : vector<4x128xi1>, vector<4x128xf32>
    %131 = arith.mulf %130, %108 : vector<4x128xf32>
    %132 = arith.addf %95, %131 : vector<4x128xf32>
    %133 = arith.mulf %130, %130 : vector<4x128xf32>
    %134 = arith.addf %97, %133 : vector<4x128xf32>
    %c384_i32 = arith.constant 384 : i32
    %135 = arith.addi %23, %c384_i32 : i32
    %136 = tpu.assume_multiple %135, 128 : i32
    %137 = vector.broadcast %136 : i32 to vector<4x128xi32>
    %138 = arith.addi %6, %137 : vector<4x128xi32>
    %139 = arith.cmpi slt, %138, %9 : vector<4x128xi32>
    %c0_48 = arith.constant 0 : index
    %140 = arith.index_cast %136 : i32 to index
    %141 = vector.load %arg5[%c0_48, %140] : memref<4x512xf32, #tpu.memory_space<vmem>>, vector<4x128xf32>
    %c1000_i32_49 = arith.constant 1000 : i32
    %142 = vector.broadcast %c1000_i32_49 : i32 to vector<4x128xi32>
    %143 = arith.cmpi slt, %138, %142 : vector<4x128xi32>
    %cst_50 = arith.constant 0.000000e+00 : f32
    %144 = vector.broadcast %cst_50 : f32 to vector<4x128xf32>
    %145 = arith.select %143, %141, %144 : vector<4x128xi1>, vector<4x128xf32>
    %146 = arith.mulf %145, %145 : vector<4x128xf32>
    %147 = arith.addf %110, %146 : vector<4x128xf32>
    %c0_51 = arith.constant 0 : index
    %148 = arith.index_cast %136 : i32 to index
    %149 = vector.load %arg2[%c0_51, %148] : memref<4x512xf32, #tpu.memory_space<vmem>>, vector<4x128xf32>
    %cst_52 = arith.constant 0.000000e+00 : f32
    %150 = vector.broadcast %cst_52 : f32 to vector<4x128xf32>
    %151 = arith.select %139, %149, %150 : vector<4x128xi1>, vector<4x128xf32>
    %152 = arith.mulf %151, %145 : vector<4x128xf32>
    %153 = arith.addf %116, %152 : vector<4x128xf32>
    %154 = arith.mulf %151, %151 : vector<4x128xf32>
    %155 = arith.addf %118, %154 : vector<4x128xf32>
    %c0_53 = arith.constant 0 : index
    %156 = arith.index_cast %136 : i32 to index
    %157 = vector.load %arg3[%c0_53, %156] : memref<4x512xf32, #tpu.memory_space<vmem>>, vector<4x128xf32>
    %cst_54 = arith.constant 0.000000e+00 : f32
    %158 = vector.broadcast %cst_54 : f32 to vector<4x128xf32>
    %159 = arith.select %139, %157, %158 : vector<4x128xi1>, vector<4x128xf32>
    %160 = arith.mulf %159, %145 : vector<4x128xf32>
    %161 = arith.addf %124, %160 : vector<4x128xf32>
    %162 = arith.mulf %159, %159 : vector<4x128xf32>
    %163 = arith.addf %126, %162 : vector<4x128xf32>
    %c0_55 = arith.constant 0 : index
    %164 = arith.index_cast %136 : i32 to index
    %165 = vector.load %arg4[%c0_55, %164] : memref<4x512xf32, #tpu.memory_space<vmem>>, vector<4x128xf32>
    %cst_56 = arith.constant 0.000000e+00 : f32
    %166 = vector.broadcast %cst_56 : f32 to vector<4x128xf32>
    %167 = arith.select %139, %165, %166 : vector<4x128xi1>, vector<4x128xf32>
    %168 = arith.mulf %167, %145 : vector<4x128xf32>
    %169 = arith.addf %132, %168 : vector<4x128xf32>
    %170 = arith.mulf %167, %167 : vector<4x128xf32>
    %171 = arith.addf %134, %170 : vector<4x128xf32>
    %c1_i32 = arith.constant 1 : i32
    %c0_57 = arith.constant 0 : index
    %c0_58 = arith.constant 0 : index
    %c0_59 = arith.constant 0 : index
    %172 = vector.load %arg7[%c0_57, %c0_58, %c0_59] : memref<3x4x128xf32, #tpu.memory_space<vmem>>, vector<1x4x128xf32>
    %173 = vector.shape_cast %172 : vector<1x4x128xf32> to vector<4x128xf32>
    %174 = vector.shape_cast %153 : vector<4x128xf32> to vector<1x4x128xf32>
    tpu.vector_store %arg7[%c0_57, %c0_58, %c0_59], %174 {strides = array<i32>} : memref<3x4x128xf32, #tpu.memory_space<vmem>>, vector<1x4x128xf32>,
    %c0_60 = arith.constant 0 : index
    %c0_61 = arith.constant 0 : index
    %c0_62 = arith.constant 0 : index
    %175 = vector.load %arg8[%c0_60, %c0_61, %c0_62] : memref<3x4x128xf32, #tpu.memory_space<vmem>>, vector<1x4x128xf32>
    %176 = vector.shape_cast %175 : vector<1x4x128xf32> to vector<4x128xf32>
    %177 = vector.shape_cast %155 : vector<4x128xf32> to vector<1x4x128xf32>
    tpu.vector_store %arg8[%c0_60, %c0_61, %c0_62], %177 {strides = array<i32>} : memref<3x4x128xf32, #tpu.memory_space<vmem>>, vector<1x4x128xf32>,
    %c1_63 = arith.constant 1 : index
    %c0_64 = arith.constant 0 : index
    %c0_65 = arith.constant 0 : index
    %178 = vector.load %arg7[%c1_63, %c0_64, %c0_65] : memref<3x4x128xf32, #tpu.memory_space<vmem>>, vector<1x4x128xf32>
    %179 = vector.shape_cast %178 : vector<1x4x128xf32> to vector<4x128xf32>
    %180 = vector.shape_cast %161 : vector<4x128xf32> to vector<1x4x128xf32>
    tpu.vector_store %arg7[%c1_63, %c0_64, %c0_65], %180 {strides = array<i32>} : memref<3x4x128xf32, #tpu.memory_space<vmem>>, vector<1x4x128xf32>,
    %c1_66 = arith.constant 1 : index
    %c0_67 = arith.constant 0 : index
    %c0_68 = arith.constant 0 : index
    %181 = vector.load %arg8[%c1_66, %c0_67, %c0_68] : memref<3x4x128xf32, #tpu.memory_space<vmem>>, vector<1x4x128xf32>
    %182 = vector.shape_cast %181 : vector<1x4x128xf32> to vector<4x128xf32>
    %183 = vector.shape_cast %163 : vector<4x128xf32> to vector<1x4x128xf32>
    tpu.vector_store %arg8[%c1_66, %c0_67, %c0_68], %183 {strides = array<i32>} : memref<3x4x128xf32, #tpu.memory_space<vmem>>, vector<1x4x128xf32>,
    %c2_69 = arith.constant 2 : index
    %c0_70 = arith.constant 0 : index
    %c0_71 = arith.constant 0 : index
    %184 = vector.load %arg7[%c2_69, %c0_70, %c0_71] : memref<3x4x128xf32, #tpu.memory_space<vmem>>, vector<1x4x128xf32>
    %185 = vector.shape_cast %184 : vector<1x4x128xf32> to vector<4x128xf32>
    %186 = vector.shape_cast %169 : vector<4x128xf32> to vector<1x4x128xf32>
    tpu.vector_store %arg7[%c2_69, %c0_70, %c0_71], %186 {strides = array<i32>} : memref<3x4x128xf32, #tpu.memory_space<vmem>>, vector<1x4x128xf32>,
    %c2_72 = arith.constant 2 : index
    %c0_73 = arith.constant 0 : index
    %c0_74 = arith.constant 0 : index
    %187 = vector.load %arg8[%c2_72, %c0_73, %c0_74] : memref<3x4x128xf32, #tpu.memory_space<vmem>>, vector<1x4x128xf32>
    %188 = vector.shape_cast %187 : vector<1x4x128xf32> to vector<4x128xf32>
    %189 = vector.shape_cast %171 : vector<4x128xf32> to vector<1x4x128xf32>
    tpu.vector_store %arg8[%c2_72, %c0_73, %c0_74], %189 {strides = array<i32>} : memref<3x4x128xf32, #tpu.memory_space<vmem>>, vector<1x4x128xf32>,
    %c0_75 = arith.constant 0 : index
    %c0_76 = arith.constant 0 : index
    %190 = vector.load %arg9[%c0_75, %c0_76] : memref<4x128xf32, #tpu.memory_space<vmem>>, vector<4x128xf32>
    tpu.vector_store %arg9[%c0_75, %c0_76], %147 {strides = array<i32>} : memref<4x128xf32, #tpu.memory_space<vmem>>, vector<4x128xf32>,
    %c1_i32_77 = arith.constant 1 : i32
    %191 = arith.cmpi eq, %arg0, %c1_i32_77 : i32
    %192 = arith.extui %191 : i1 to i32
    %c0_i32_78 = arith.constant 0 : i32
    %193 = arith.cmpi ne, %192, %c0_i32_78 : i32
    scf.if %193 {
      %c0_79 = arith.constant 0 : index
      %c0_80 = arith.constant 0 : index
      %194 = vector.load %arg9[%c0_79, %c0_80] : memref<4x128xf32, #tpu.memory_space<vmem>>, vector<4x128xf32>
      %cst_81 = arith.constant dense<0.000000e+00> : vector<4xf32>
      %195 = vector.multi_reduction <add>, %194, %cst_81 [1] : vector<4x128xf32> to vector<4xf32>
      %196 = vector.shape_cast %195 : vector<4xf32> to vector<4x1xf32>
      %c0_82 = arith.constant 0 : index
      %c0_83 = arith.constant 0 : index
      %c0_84 = arith.constant 0 : index
      %197 = vector.load %arg7[%c0_82, %c0_83, %c0_84] : memref<3x4x128xf32, #tpu.memory_space<vmem>>, vector<1x4x128xf32>
      %198 = vector.shape_cast %197 : vector<1x4x128xf32> to vector<4x128xf32>
      %cst_85 = arith.constant dense<0.000000e+00> : vector<4xf32>
      %199 = vector.multi_reduction <add>, %198, %cst_85 [1] : vector<4x128xf32> to vector<4xf32>
      %200 = vector.shape_cast %199 : vector<4xf32> to vector<4x1xf32>
      %c0_86 = arith.constant 0 : index
      %c0_87 = arith.constant 0 : index
      %c0_88 = arith.constant 0 : index
      %201 = vector.load %arg8[%c0_86, %c0_87, %c0_88] : memref<3x4x128xf32, #tpu.memory_space<vmem>>, vector<1x4x128xf32>
      %202 = vector.shape_cast %201 : vector<1x4x128xf32> to vector<4x128xf32>
      %cst_89 = arith.constant dense<0.000000e+00> : vector<4xf32>
      %203 = vector.multi_reduction <add>, %202, %cst_89 [1] : vector<4x128xf32> to vector<4xf32>
      %204 = vector.shape_cast %203 : vector<4xf32> to vector<4x1xf32>
      %cst_90 = arith.constant 9.99999997E-7 : f32
      %205 = vector.broadcast %cst_90 : f32 to vector<4x1xf32>
      %206 = arith.addf %200, %205 : vector<4x1xf32>
      %cst_91 = arith.constant 9.99999997E-7 : f32
      %207 = vector.broadcast %cst_91 : f32 to vector<4x1xf32>
      %208 = arith.addf %196, %207 : vector<4x1xf32>
      %209 = arith.divf %206, %208 : vector<4x1xf32>
      %210 = arith.mulf %209, %196 : vector<4x1xf32>
      %211 = arith.mulf %209, %210 : vector<4x1xf32>
      %cst_92 = arith.constant 9.99999997E-7 : f32
      %212 = vector.broadcast %cst_92 : f32 to vector<4x1xf32>
      %213 = arith.addf %211, %212 : vector<4x1xf32>
      %214 = arith.mulf %209, %210 : vector<4x1xf32>
      %cst_93 = arith.constant 2.000000e+00 : f32
      %215 = vector.broadcast %cst_93 : f32 to vector<4x1xf32>
      %216 = arith.mulf %215, %209 : vector<4x1xf32>
      %217 = arith.mulf %216, %200 : vector<4x1xf32>
      %218 = arith.subf %214, %217 : vector<4x1xf32>
      %219 = arith.addf %218, %204 : vector<4x1xf32>
      %cst_94 = arith.constant 9.99999997E-7 : f32
      %220 = vector.broadcast %cst_94 : f32 to vector<4x1xf32>
      %221 = arith.addf %219, %220 : vector<4x1xf32>
      %cst_95 = arith.constant 9.99999997E-7 : f32
      %222 = vector.broadcast %cst_95 : f32 to vector<4x1xf32>
      %223 = arith.maximumf %221, %222 : vector<4x1xf32>
      %224 = arith.divf %213, %223 : vector<4x1xf32>
      %225 = math.log %224 : vector<4x1xf32>
      %cst_96 = arith.constant 0.434294492 : f32
      %226 = vector.broadcast %cst_96 : f32 to vector<4x1xf32>
      %227 = arith.mulf %225, %226 : vector<4x1xf32>
      %cst_97 = arith.constant 2.000000e+01 : f32
      %228 = vector.broadcast %cst_97 : f32 to vector<4x1xf32>
      %229 = arith.mulf %228, %227 : vector<4x1xf32>
      %230 = vector.shape_cast %229 : vector<4x1xf32> to vector<1x4x1xf32>
      %cst_98 = arith.constant dense<0.000000e+00> : vector<1xf32>
      %231 = vector.multi_reduction <add>, %230, %cst_98 [1, 2] : vector<1x4x1xf32> to vector<1xf32>
      %232 = vector.shape_cast %231 : vector<1xf32> to vector<1x1x1xf32>
      %233 = vector.extract %232[0, 0, 0] : f32 from vector<1x1x1xf32>
      %cst_99 = arith.constant 6.000000e-01 : f32
      %234 = arith.mulf %cst_99, %233 : f32
      %c1_100 = arith.constant 1 : index
      %c0_101 = arith.constant 0 : index
      %c0_102 = arith.constant 0 : index
      %235 = vector.load %arg7[%c1_100, %c0_101, %c0_102] : memref<3x4x128xf32, #tpu.memory_space<vmem>>, vector<1x4x128xf32>
      %236 = vector.shape_cast %235 : vector<1x4x128xf32> to vector<4x128xf32>
      %cst_103 = arith.constant dense<0.000000e+00> : vector<4xf32>
      %237 = vector.multi_reduction <add>, %236, %cst_103 [1] : vector<4x128xf32> to vector<4xf32>
      %238 = vector.shape_cast %237 : vector<4xf32> to vector<4x1xf32>
      %c1_104 = arith.constant 1 : index
      %c0_105 = arith.constant 0 : index
      %c0_106 = arith.constant 0 : index
      %239 = vector.load %arg8[%c1_104, %c0_105, %c0_106] : memref<3x4x128xf32, #tpu.memory_space<vmem>>, vector<1x4x128xf32>
      %240 = vector.shape_cast %239 : vector<1x4x128xf32> to vector<4x128xf32>
      %cst_107 = arith.constant dense<0.000000e+00> : vector<4xf32>
      %241 = vector.multi_reduction <add>, %240, %cst_107 [1] : vector<4x128xf32> to vector<4xf32>
      %242 = vector.shape_cast %241 : vector<4xf32> to vector<4x1xf32>
      %cst_108 = arith.constant 9.99999997E-7 : f32
      %243 = vector.broadcast %cst_108 : f32 to vector<4x1xf32>
      %244 = arith.addf %238, %243 : vector<4x1xf32>
      %cst_109 = arith.constant 9.99999997E-7 : f32
      %245 = vector.broadcast %cst_109 : f32 to vector<4x1xf32>
      %246 = arith.addf %196, %245 : vector<4x1xf32>
      %247 = arith.divf %244, %246 : vector<4x1xf32>
      %248 = arith.mulf %247, %196 : vector<4x1xf32>
      %249 = arith.mulf %247, %248 : vector<4x1xf32>
      %cst_110 = arith.constant 9.99999997E-7 : f32
      %250 = vector.broadcast %cst_110 : f32 to vector<4x1xf32>
      %251 = arith.addf %249, %250 : vector<4x1xf32>
      %252 = arith.mulf %247, %248 : vector<4x1xf32>
      %cst_111 = arith.constant 2.000000e+00 : f32
      %253 = vector.broadcast %cst_111 : f32 to vector<4x1xf32>
      %254 = arith.mulf %253, %247 : vector<4x1xf32>
      %255 = arith.mulf %254, %238 : vector<4x1xf32>
      %256 = arith.subf %252, %255 : vector<4x1xf32>
      %257 = arith.addf %256, %242 : vector<4x1xf32>
      %cst_112 = arith.constant 9.99999997E-7 : f32
      %258 = vector.broadcast %cst_112 : f32 to vector<4x1xf32>
      %259 = arith.addf %257, %258 : vector<4x1xf32>
      %cst_113 = arith.constant 9.99999997E-7 : f32
      %260 = vector.broadcast %cst_113 : f32 to vector<4x1xf32>
      %261 = arith.maximumf %259, %260 : vector<4x1xf32>
      %262 = arith.divf %251, %261 : vector<4x1xf32>
      %263 = math.log %262 : vector<4x1xf32>
      %cst_114 = arith.constant 0.434294492 : f32
      %264 = vector.broadcast %cst_114 : f32 to vector<4x1xf32>
      %265 = arith.mulf %263, %264 : vector<4x1xf32>
      %cst_115 = arith.constant 2.000000e+01 : f32
      %266 = vector.broadcast %cst_115 : f32 to vector<4x1xf32>
      %267 = arith.mulf %266, %265 : vector<4x1xf32>
      %268 = vector.shape_cast %267 : vector<4x1xf32> to vector<1x4x1xf32>
      %cst_116 = arith.constant dense<0.000000e+00> : vector<1xf32>
      %269 = vector.multi_reduction <add>, %268, %cst_116 [1, 2] : vector<1x4x1xf32> to vector<1xf32>
      %270 = vector.shape_cast %269 : vector<1xf32> to vector<1x1x1xf32>
      %271 = vector.extract %270[0, 0, 0] : f32 from vector<1x1x1xf32>
      %cst_117 = arith.constant 2.000000e-01 : f32
      %272 = arith.mulf %cst_117, %271 : f32
      %273 = arith.addf %234, %272 : f32
      %c2_118 = arith.constant 2 : index
      %c0_119 = arith.constant 0 : index
      %c0_120 = arith.constant 0 : index
      %274 = vector.load %arg7[%c2_118, %c0_119, %c0_120] : memref<3x4x128xf32, #tpu.memory_space<vmem>>, vector<1x4x128xf32>
      %275 = vector.shape_cast %274 : vector<1x4x128xf32> to vector<4x128xf32>
      %cst_121 = arith.constant dense<0.000000e+00> : vector<4xf32>
      %276 = vector.multi_reduction <add>, %275, %cst_121 [1] : vector<4x128xf32> to vector<4xf32>
      %277 = vector.shape_cast %276 : vector<4xf32> to vector<4x1xf32>
      %c2_122 = arith.constant 2 : index
      %c0_123 = arith.constant 0 : index
      %c0_124 = arith.constant 0 : index
      %278 = vector.load %arg8[%c2_122, %c0_123, %c0_124] : memref<3x4x128xf32, #tpu.memory_space<vmem>>, vector<1x4x128xf32>
      %279 = vector.shape_cast %278 : vector<1x4x128xf32> to vector<4x128xf32>
      %cst_125 = arith.constant dense<0.000000e+00> : vector<4xf32>
      %280 = vector.multi_reduction <add>, %279, %cst_125 [1] : vector<4x128xf32> to vector<4xf32>
      %281 = vector.shape_cast %280 : vector<4xf32> to vector<4x1xf32>
      %cst_126 = arith.constant 9.99999997E-7 : f32
      %282 = vector.broadcast %cst_126 : f32 to vector<4x1xf32>
      %283 = arith.addf %277, %282 : vector<4x1xf32>
      %cst_127 = arith.constant 9.99999997E-7 : f32
      %284 = vector.broadcast %cst_127 : f32 to vector<4x1xf32>
      %285 = arith.addf %196, %284 : vector<4x1xf32>
      %286 = arith.divf %283, %285 : vector<4x1xf32>
      %287 = arith.mulf %286, %196 : vector<4x1xf32>
      %288 = arith.mulf %286, %287 : vector<4x1xf32>
      %cst_128 = arith.constant 9.99999997E-7 : f32
      %289 = vector.broadcast %cst_128 : f32 to vector<4x1xf32>
      %290 = arith.addf %288, %289 : vector<4x1xf32>
      %291 = arith.mulf %286, %287 : vector<4x1xf32>
      %cst_129 = arith.constant 2.000000e+00 : f32
      %292 = vector.broadcast %cst_129 : f32 to vector<4x1xf32>
      %293 = arith.mulf %292, %286 : vector<4x1xf32>
      %294 = arith.mulf %293, %277 : vector<4x1xf32>
      %295 = arith.subf %291, %294 : vector<4x1xf32>
      %296 = arith.addf %295, %281 : vector<4x1xf32>
      %cst_130 = arith.constant 9.99999997E-7 : f32
      %297 = vector.broadcast %cst_130 : f32 to vector<4x1xf32>
      %298 = arith.addf %296, %297 : vector<4x1xf32>
      %cst_131 = arith.constant 9.99999997E-7 : f32
      %299 = vector.broadcast %cst_131 : f32 to vector<4x1xf32>
      %300 = arith.maximumf %298, %299 : vector<4x1xf32>
      %301 = arith.divf %290, %300 : vector<4x1xf32>
      %302 = math.log %301 : vector<4x1xf32>
      %cst_132 = arith.constant 0.434294492 : f32
      %303 = vector.broadcast %cst_132 : f32 to vector<4x1xf32>
      %304 = arith.mulf %302, %303 : vector<4x1xf32>
      %cst_133 = arith.constant 2.000000e+01 : f32
      %305 = vector.broadcast %cst_133 : f32 to vector<4x1xf32>
      %306 = arith.mulf %305, %304 : vector<4x1xf32>
      %307 = vector.shape_cast %306 : vector<4x1xf32> to vector<1x4x1xf32>
      %cst_134 = arith.constant dense<0.000000e+00> : vector<1xf32>
      %308 = vector.multi_reduction <add>, %307, %cst_134 [1, 2] : vector<1x4x1xf32> to vector<1xf32>
      %309 = vector.shape_cast %308 : vector<1xf32> to vector<1x1x1xf32>
      %310 = vector.extract %309[0, 0, 0] : f32 from vector<1x1x1xf32>
      %cst_135 = arith.constant 2.000000e-01 : f32
      %311 = arith.mulf %cst_135, %310 : f32
      %312 = arith.addf %273, %311 : f32
      %cst_136 = arith.constant 0.000000e+00 : f32
      %313 = arith.subf %cst_136, %312 : f32
      %cst_137 = arith.constant 4.000000e+00 : f32
      %314 = arith.divf %313, %cst_137 : f32
      %c0_138 = arith.constant 0 : index
      %c0_139 = arith.constant 0 : index
      %315 = memref.load %arg6[%c0_138, %c0_139] : memref<1x1xf32, #tpu.memory_space<smem>>
      memref.store %314, %arg6[%c0_138, %c0_139] : memref<1x1xf32, #tpu.memory_space<smem>>
    } else {
    }
    return
  }
  func.func @transform_0(%arg0: i32) -> (i32, i32) {
    %c0_i32 = arith.constant 0 : i32
    %c0_i32_0 = arith.constant 0 : i32
    %c0_i32_1 = arith.constant 0 : i32
    return %c0_i32, %c0_i32_0 : i32, i32
  }
  func.func @transform_1(%arg0: i32) -> (i32, i32) {
    %c0_i32 = arith.constant 0 : i32
    %c0_i32_0 = arith.constant 0 : i32
    return %c0_i32, %arg0 : i32, i32
  }
  func.func @transform_2(%arg0: i32) -> (i32, i32) {
    %c0_i32 = arith.constant 0 : i32
    %c0_i32_0 = arith.constant 0 : i32
    return %c0_i32, %arg0 : i32, i32
  }
  func.func @transform_3(%arg0: i32) -> (i32, i32) {
    %c0_i32 = arith.constant 0 : i32
    %c0_i32_0 = arith.constant 0 : i32
    return %c0_i32, %arg0 : i32, i32
  }
  func.func @transform_4(%arg0: i32) -> (i32, i32) {
    %c0_i32 = arith.constant 0 : i32
    %c0_i32_0 = arith.constant 0 : i32
    return %c0_i32, %arg0 : i32, i32
  }
  func.func @transform_5(%arg0: i32) -> (i32, i32) {
    %c0_i32 = arith.constant 0 : i32
    %c0_i32_0 = arith.constant 0 : i32
    %c0_i32_1 = arith.constant 0 : i32
    return %c0_i32, %c0_i32_0 : i32, i32
  }
}

</mosaic_0001>

<llo_original>
// kernel: tpu_custom_call.1
$region0: #{tpu_custom_call.1}
  #allocation0 [shape = 'u32[]', space=smem, size = 0x4, offset = 0x4, fixed_abs, tag = 'smem constant byte address 0x4 - core index']
  #allocation1 [shape = 'u32[144,128]{1,0:T(1,128)}', space=vmem, size = 0x12000, scoped, tag = 'internal scratch']
  #allocation2 [shape = 'f32[3,4,128]{2,1,0:T(4,128)}', space=vmem, size = 0x1800, scoped, tag = 'scratch operand']
  #allocation3 [shape = 'f32[3,4,128]{2,1,0:T(4,128)}', space=vmem, size = 0x1800, scoped, tag = 'scratch operand']
  #allocation4 [shape = 'f32[4,128]{1,0:T(4,128)}', space=vmem, size = 0x800, scoped, tag = 'scratch operand']
  %s0 = inlined_call_operand.vmem [shape: s32[4,1], index: 0, kind: input, shape index: {}]
  %s1 = inlined_call_operand.hbm [shape: f32[4,1000], index: 1, kind: input, shape index: {}]
  %s2 = inlined_call_operand.hbm [shape: f32[4,1000], index: 2, kind: input, shape index: {}]
  %s3 = inlined_call_operand.hbm [shape: f32[4,1000], index: 3, kind: input, shape index: {}]
  %s4 = inlined_call_operand.hbm [shape: f32[4,1000], index: 4, kind: input, shape index: {}]
  %s5 = inlined_call_operand.hbm [shape: f32[1,1], index: 5, kind: output, shape index: {}]
  %s6 = sld [smem:[#allocation0]]
  $region77: #{tpu_custom_call.1} parent=0
    _
  %s8 = ssub.s32 1, %s6
  %s9 = scalar_select 0, %s8, %s6
  $region1: #{tpu_custom_call.1} parent=0
    #allocation5 [shape = 'u8[16384]{0}', space=vmem, size = 0x4000, scoped, tag = 'input window, operand 1']
    #allocation6 [shape = 's32[2]{0}', space=sflag, size = 0x8, scoped, tag = 'scoped memory for tpu_custom_call.1']
    #allocation7 [shape = 's32[2]{0}', space=sflag, size = 0x8, scoped, tag = 'scoped memory for tpu_custom_call.1']
    #allocation8 [shape = 'u8[16384]{0}', space=vmem, size = 0x4000, scoped, tag = 'input window, operand 2']
    #allocation9 [shape = 's32[2]{0}', space=sflag, size = 0x8, scoped, tag = 'scoped memory for tpu_custom_call.1']
    #allocation10 [shape = 'u8[16384]{0}', space=vmem, size = 0x4000, scoped, tag = 'input window, operand 3']
    #allocation11 [shape = 'u8[16384]{0}', space=vmem, size = 0x4000, scoped, tag = 'input window, operand 4']
    #allocation12 [shape = 's32[2]{0}', space=sflag, size = 0x8, scoped, tag = 'scoped memory for tpu_custom_call.1']
    #allocation13 [shape = 'u8[512]{0}', space=smem, size = 0x200, scoped, tag = 'output window, operand 0, single buffered']
    %10 = vsyncpa [#allocation6], 0
    %s11 = scalar_lea.sflag [#allocation6], 1
    %12 = vsyncpa %s11, 0
    %13 = vsyncpa [#allocation9], 0
    %s14 = scalar_lea.sflag [#allocation9], 1
    %15 = vsyncpa %s14, 0
    %16 = vsyncpa [#allocation12], 0
    %s17 = scalar_lea.sflag [#allocation12], 1
    %18 = vsyncpa %s17, 0
    %19 = vsyncpa [#allocation7], 0
    loop: start=0, step=1, limit=4
    $region2: #{tpu_custom_call.1} parent=1 // loop_pre_header
      _
    $region3: #{tpu_custom_call.1} parent=1 // loop_header
      %s21 = sphi 0, %s25
      %p22 = scmp.ge.s32.totalorder %s21, 4
      %s29 = sphi 0, %s29
      %s31 = sphi 0, %s29
      %s32 = sphi 0, %s31
      %s46 = sphi 0, %s32
      %s52 = sphi 0, %s54
      %s55 = sphi 0, %s52
      %s56 = sphi 0, %s55
      %s72 = sphi 0, %s56
      %s78 = sphi 0, %s80
      %s81 = sphi 0, %s78
      %s82 = sphi 0, %s81
      %s98 = sphi 0, %s82
      %s104 = sphi 0, %s106
      %s107 = sphi 0, %s104
      %s108 = sphi 0, %s107
      %s124 = sphi 0, %s108
      %s130 = sphi 0, %s132
      %s133 = sphi 0, %s130
      %s134 = sphi 0, %s133
      %s150 = sphi 0, %s134
      %s154 = sphi 0, %s154
      %s156 = sphi 0, %s154
      %s157 = sphi 0, %s156
      %s171 = sphi 0, %s157
    $region4: #{tpu_custom_call.1} parent=1 // loop_header_branch
      %24 = sbr.rel (%p22) target = $region8
    $region5: #{tpu_custom_call.1} parent=1 // loop_body
      %s26 = ssub.s32 %s21, 1
      %s27 = ssub.s32 %s21, 2
      %s28 = sadd.s32 %s21, 1
      %s30 = sadd.s32 %s29, 1
      %p33 = scmp.eq.s32.totalorder %s21, 1
      %p34 = scmp.ne.s32.totalorder %s29, %s31
      %p35 = scmp.eq.s32.totalorder %s21, 0
      %p36 = por %p34, %p35
      %p37 = scmp.ne.s32.totalorder %s29, %s31
      %p38 = scmp.eq.s32.totalorder %s26, 1
      %p39 = por %p37, %p38
      %p40 = scmp.ne.s32.totalorder %s31, %s32
      %p41 = scmp.eq.s32.totalorder %s26, 0
      %p42 = por %p40, %p41
      %p43 = scmp.ne.s32.totalorder %s31, %s32
      %p44 = scmp.eq.s32.totalorder %s27, 1
      %p45 = por %p43, %p44
      %p47 = scmp.ne.s32.totalorder %s32, %s46
      %p48 = scmp.eq.s32.totalorder %s27, 0
      %p49 = por %p47, %p48
      %s50 = ssub.s32 %s21, %s28
      %p51 = scmp.eq.s32.totalorder %s50, 0
      %s53 = sadd.s32 %s52, 1
      %s54 = scalar_select %p51, %s52, %s53
      %p57 = pneg %p51
      %p58 = scmp.eq.s32.totalorder %s21, 1
      %p59 = por %p57, %p58
      %p60 = scmp.ne.s32.totalorder %s52, %s55
      %p61 = scmp.eq.s32.totalorder %s21, 0
      %p62 = por %p60, %p61
      %p63 = scmp.ne.s32.totalorder %s52, %s55
      %p64 = scmp.eq.s32.totalorder %s26, 1
      %p65 = por %p63, %p64
      %p66 = scmp.ne.s32.totalorder %s55, %s56
      %p67 = scmp.eq.s32.totalorder %s26, 0
      %p68 = por %p66, %p67
      %p69 = scmp.ne.s32.totalorder %s55, %s56
      %p70 = scmp.eq.s32.totalorder %s27, 1
      %p71 = por %p69, %p70
      %p73 = scmp.ne.s32.totalorder %s56, %s72
      %p74 = scmp.eq.s32.totalorder %s27, 0
      %p75 = por %p73, %p74
      %s76 = ssub.s32 %s21, %s28
      %p77 = scmp.eq.s32.totalorder %s76, 0
      %s79 = sadd.s32 %s78, 1
      %s80 = scalar_select %p77, %s78, %s79
      %p83 = pneg %p77
      %p84 = scmp.eq.s32.totalorder %s21, 1
      %p85 = por %p83, %p84
      %p86 = scmp.ne.s32.totalorder %s78, %s81
      %p87 = scmp.eq.s32.totalorder %s21, 0
      %p88 = por %p86, %p87
      %p89 = scmp.ne.s32.totalorder %s78, %s81
      %p90 = scmp.eq.s32.totalorder %s26, 1
      %p91 = por %p89, %p90
      %p92 = scmp.ne.s32.totalorder %s81, %s82
      %p93 = scmp.eq.s32.totalorder %s26, 0
      %p94 = por %p92, %p93
      %p95 = scmp.ne.s32.totalorder %s81, %s82
      %p96 = scmp.eq.s32.totalorder %s27, 1
      %p97 = por %p95, %p96
      %p99 = scmp.ne.s32.totalorder %s82, %s98
      %p100 = scmp.eq.s32.totalorder %s27, 0
      %p101 = por %p99, %p100
      %s102 = ssub.s32 %s21, %s28
      %p103 = scmp.eq.s32.totalorder %s102, 0
      %s105 = sadd.s32 %s104, 1
      %s106 = scalar_select %p103, %s104, %s105
      %p109 = pneg %p103
      %p110 = scmp.eq.s32.totalorder %s21, 1
      %p111 = por %p109, %p110
      %p112 = scmp.ne.s32.totalorder %s104, %s107
      %p113 = scmp.eq.s32.totalorder %s21, 0
      %p114 = por %p112, %p113
      %p115 = scmp.ne.s32.totalorder %s104, %s107
      %p116 = scmp.eq.s32.totalorder %s26, 1
      %p117 = por %p115, %p116
      %p118 = scmp.ne.s32.totalorder %s107, %s108
      %p119 = scmp.eq.s32.totalorder %s26, 0
      %p120 = por %p118, %p119
      %p121 = scmp.ne.s32.totalorder %s107, %s108
      %p122 = scmp.eq.s32.totalorder %s27, 1
      %p123 = por %p121, %p122
      %p125 = scmp.ne.s32.totalorder %s108, %s124
      %p126 = scmp.eq.s32.totalorder %s27, 0
      %p127 = por %p125, %p126
      %s128 = ssub.s32 %s21, %s28
      %p129 = scmp.eq.s32.totalorder %s128, 0
      %s131 = sadd.s32 %s130, 1
      %s132 = scalar_select %p129, %s130, %s131
      %p135 = pneg %p129
      %p136 = scmp.eq.s32.totalorder %s21, 1
      %p137 = por %p135, %p136
      %p138 = scmp.ne.s32.totalorder %s130, %s133
      %p139 = scmp.eq.s32.totalorder %s21, 0
      %p140 = por %p138, %p139
      %p141 = scmp.ne.s32.totalorder %s130, %s133
      %p142 = scmp.eq.s32.totalorder %s26, 1
      %p143 = por %p141, %p142
      %p144 = scmp.ne.s32.totalorder %s133, %s134
      %p145 = scmp.eq.s32.totalorder %s26, 0
      %p146 = por %p144, %p145
      %p147 = scmp.ne.s32.totalorder %s133, %s134
      %p148 = scmp.eq.s32.totalorder %s27, 1
      %p149 = por %p147, %p148
      %p151 = scmp.ne.s32.totalorder %s134, %s150
      %p152 = scmp.eq.s32.totalorder %s27, 0
      %p153 = por %p151, %p152
      %s155 = sadd.s32 %s154, 1
      %p158 = scmp.eq.s32.totalorder %s21, 1
      %p159 = scmp.ne.s32.totalorder %s154, %s156
      %p160 = scmp.eq.s32.totalorder %s21, 0
      %p161 = por %p159, %p160
      %p162 = scmp.ne.s32.totalorder %s154, %s156
      %p163 = scmp.eq.s32.totalorder %s26, 1
      %p164 = por %p162, %p163
      %p165 = scmp.ne.s32.totalorder %s156, %s157
      %p166 = scmp.eq.s32.totalorder %s26, 0
      %p167 = por %p165, %p166
      %p168 = scmp.ne.s32.totalorder %s156, %s157
      %p169 = scmp.eq.s32.totalorder %s27, 1
      %p170 = por %p168, %p169
      %p172 = scmp.ne.s32.totalorder %s157, %s171
      %p173 = scmp.eq.s32.totalorder %s27, 0
      %p174 = por %p172, %p173
      %p175 = scmp.le.s32.totalorder 1, %s21
      %p176 = scmp.lt.s32.totalorder %s21, 3
      %p177 = pnand %p175, %p176
      %p178 = pneg %p177
      // Predicated region
      $region9: #{tpu_custom_call.1} parent=5 // pred_check
        _
      $region10: #{tpu_custom_call.1} parent=5 // pred_check_branch
        %180 = sbr.rel (%p177) target = $region12
      $region11: #{tpu_custom_call.1} parent=5 // pred_region
        %s181 = ssub.s32 %s21, 1
        // Predicated region
        $region13: #{tpu_custom_call.1} parent=11 // pred_check
          %p182 = pneg %p42
        $region14: #{tpu_custom_call.1} parent=11 // pred_check_branch
          %184 = sbr.rel (%p182) target = $region16
        $region15: #{tpu_custom_call.1} parent=11 // pred_region
          _
        $region16: #{tpu_custom_call.1} parent=11 // pred_fallthru
          _
      $region12: #{tpu_custom_call.1} parent=5 // pred_fallthru
        _
      %p185 = scmp.lt.s32.totalorder %s21, 2
      // Predicated region
      $region17: #{tpu_custom_call.1} parent=5 // pred_check
        %p186 = pneg %p185
      $region18: #{tpu_custom_call.1} parent=5 // pred_check_branch
        %188 = sbr.rel (%p186) target = $region20
      $region19: #{tpu_custom_call.1} parent=5 // pred_region
        // Predicated region
        $region21: #{tpu_custom_call.1} parent=19 // pred_check
          %p189 = pneg %p62
        $region22: #{tpu_custom_call.1} parent=19 // pred_check_branch
          %191 = sbr.rel (%p189) target = $region24
        $region23: #{tpu_custom_call.1} parent=19 // pred_region
          %s192 = sand.u32 %s52, 1
          %s193 = scalar_lea.sflag [#allocation6], %s192
          %s194 = sand.u32 %s52, 1
          %s195 = smul.addr %s194, 16
          %s196 = scalar_lea.vmem [#allocation5], %s195
          %s197 = smul.u32 4, %s21
          %s199 = ssub.s32 256, 256
          %200 = vsyncadd %s193, %s199
          %s201 = smul.addr %s197, 64
          %s202 = scalar_lea.hbm %s1, %s201
          %s204 = sshll.u32 %s196, 4
          %s205 = int_to_ptr.vmem [resolvable:$true] %s204
          %207 = dma.hbm_to_vmem [thread:$0]  %s202, 256, %s205, %s193
        $region24: #{tpu_custom_call.1} parent=19 // pred_fallthru
          _
        // Predicated region
        $region25: #{tpu_custom_call.1} parent=19 // pred_check
          %p208 = pneg %p88
        $region26: #{tpu_custom_call.1} parent=19 // pred_check_branch
          %210 = sbr.rel (%p208) target = $region28
        $region27: #{tpu_custom_call.1} parent=19 // pred_region
          %s211 = sand.u32 %s21, 1
          %s212 = scalar_lea.sflag [#allocation9], %s211
          %s213 = sand.u32 %s78, 1
          %s214 = smul.addr %s213, 16
          %s215 = scalar_lea.vmem [#allocation8], %s214
          %s216 = smul.u32 4, %s21
          %s218 = ssub.s32 256, 256
          %219 = vsyncadd %s212, %s218
          %s220 = smul.addr %s216, 64
          %s221 = scalar_lea.hbm %s2, %s220
          %s223 = sshll.u32 %s215, 4
          %s224 = int_to_ptr.vmem [resolvable:$true] %s223
          %226 = dma.hbm_to_vmem [thread:$0]  %s221, 256, %s224, %s212
        $region28: #{tpu_custom_call.1} parent=19 // pred_fallthru
          _
        // Predicated region
        $region29: #{tpu_custom_call.1} parent=19 // pred_check
          %p227 = pneg %p114
        $region30: #{tpu_custom_call.1} parent=19 // pred_check_branch
          %229 = sbr.rel (%p227) target = $region32
        $region31: #{tpu_custom_call.1} parent=19 // pred_region
          %s230 = sand.u32 %s21, 1
          %s231 = scalar_lea.sflag [#allocation9], %s230
          %s232 = sand.u32 %s104, 1
          %s233 = smul.addr %s232, 16
          %s234 = scalar_lea.vmem [#allocation10], %s233
          %s235 = smul.u32 4, %s21
          %s237 = ssub.s32 256, 256
          %238 = vsyncadd %s231, %s237
          %s239 = smul.addr %s235, 64
          %s240 = scalar_lea.hbm %s3, %s239
          %s242 = sshll.u32 %s234, 4
          %s243 = int_to_ptr.vmem [resolvable:$true] %s242
          %245 = dma.hbm_to_vmem [thread:$0]  %s240, 256, %s243, %s231
        $region32: #{tpu_custom_call.1} parent=19 // pred_fallthru
          _
        // Predicated region
        $region33: #{tpu_custom_call.1} parent=19 // pred_check
          %p246 = pneg %p140
        $region34: #{tpu_custom_call.1} parent=19 // pred_check_branch
          %248 = sbr.rel (%p246) target = $region36
        $region35: #{tpu_custom_call.1} parent=19 // pred_region
          %s249 = sand.u32 %s130, 1
          %s250 = scalar_lea.sflag [#allocation12], %s249
          %s251 = sand.u32 %s130, 1
          %s252 = smul.addr %s251, 16
          %s253 = scalar_lea.vmem [#allocation11], %s252
          %s254 = smul.u32 4, %s21
          %s256 = ssub.s32 256, 256
          %257 = vsyncadd %s250, %s256
          %s258 = smul.addr %s254, 64
          %s259 = scalar_lea.hbm %s4, %s258
          %s261 = sshll.u32 %s253, 4
          %s262 = int_to_ptr.vmem [resolvable:$true] %s261
          %264 = dma.hbm_to_vmem [thread:$0]  %s259, 256, %s262, %s250
        $region36: #{tpu_custom_call.1} parent=19 // pred_fallthru
          _
      $region20: #{tpu_custom_call.1} parent=5 // pred_fallthru
        _
      %p265 = scmp.le.s32.totalorder 1, %s21
      %p266 = scmp.lt.s32.totalorder %s21, 3
      %p267 = pnand %p265, %p266
      %p268 = pneg %p267
      // Predicated region
      $region37: #{tpu_custom_call.1} parent=5 // pred_check
        _
      $region38: #{tpu_custom_call.1} parent=5 // pred_check_branch
        %270 = sbr.rel (%p267) target = $region40
      $region39: #{tpu_custom_call.1} parent=5 // pred_region
        %s271 = ssub.s32 %s21, 1
        %s272 = sand.u32 %s55, 1
        %s273 = scalar_lea.sflag [#allocation6], %s272
        %s274 = sand.u32 %s55, 1
        %s275 = smul.addr %s274, 16
        %s276 = scalar_lea.vmem [#allocation5], %s275
        // Predicated region
        $region41: #{tpu_custom_call.1} parent=39 // pred_check
          %p277 = pneg %p68
        $region42: #{tpu_custom_call.1} parent=39 // pred_check_branch
          %279 = sbr.rel (%p277) target = $region44
        $region43: #{tpu_custom_call.1} parent=39 // pred_region
          %280 = dma.done %s273, 256
        $region44: #{tpu_custom_call.1} parent=39 // pred_fallthru
          _
        %s281 = sand.u32 %s26, 1
        %s282 = scalar_lea.sflag [#allocation9], %s281
        %s283 = sand.u32 %s81, 1
        %s284 = smul.addr %s283, 16
        %s285 = scalar_lea.vmem [#allocation8], %s284
        // Predicated region
        $region45: #{tpu_custom_call.1} parent=39 // pred_check
          %p286 = pneg %p94
        $region46: #{tpu_custom_call.1} parent=39 // pred_check_branch
          %288 = sbr.rel (%p286) target = $region48
        $region47: #{tpu_custom_call.1} parent=39 // pred_region
          %289 = dma.done %s282, 256
        $region48: #{tpu_custom_call.1} parent=39 // pred_fallthru
          _
        %s290 = sand.u32 %s26, 1
        %s291 = scalar_lea.sflag [#allocation9], %s290
        %s292 = sand.u32 %s107, 1
        %s293 = smul.addr %s292, 16
        %s294 = scalar_lea.vmem [#allocation10], %s293
        // Predicated region
        $region49: #{tpu_custom_call.1} parent=39 // pred_check
          %p295 = pneg %p120
        $region50: #{tpu_custom_call.1} parent=39 // pred_check_branch
          %297 = sbr.rel (%p295) target = $region52
        $region51: #{tpu_custom_call.1} parent=39 // pred_region
          %298 = dma.done %s291, 256
        $region52: #{tpu_custom_call.1} parent=39 // pred_fallthru
          _
        %s299 = sand.u32 %s133, 1
        %s300 = scalar_lea.sflag [#allocation12], %s299
        %s301 = sand.u32 %s133, 1
        %s302 = smul.addr %s301, 16
        %s303 = scalar_lea.vmem [#allocation11], %s302
        // Predicated region
        $region53: #{tpu_custom_call.1} parent=39 // pred_check
          %p304 = pneg %p146
        $region54: #{tpu_custom_call.1} parent=39 // pred_check_branch
          %306 = sbr.rel (%p304) target = $region56
        $region55: #{tpu_custom_call.1} parent=39 // pred_region
          %307 = dma.done %s300, 256
        $region56: #{tpu_custom_call.1} parent=39 // pred_fallthru
          _
        %p308 = pneg %p42
        %p309 = pneg %p39
        %s310 = sand.u32 %s55, 1
        %s311 = scalar_lea.sflag [#allocation6], %s310
        %s312 = sand.u32 %s55, 1
        %s313 = smul.addr %s312, 16
        %s314 = scalar_lea.vmem [#allocation5], %s313
        %p315 = pneg %p68
        %p316 = pneg %p65
        %s317 = sand.u32 %s26, 1
        %s318 = scalar_lea.sflag [#allocation9], %s317
        %s319 = sand.u32 %s81, 1
        %s320 = smul.addr %s319, 16
        %s321 = scalar_lea.vmem [#allocation8], %s320
        %p322 = pneg %p94
        %p323 = pneg %p91
        %s324 = sand.u32 %s26, 1
        %s325 = scalar_lea.sflag [#allocation9], %s324
        %s326 = sand.u32 %s107, 1
        %s327 = smul.addr %s326, 16
        %s328 = scalar_lea.vmem [#allocation10], %s327
        %p329 = pneg %p120
        %p330 = pneg %p117
        %s331 = sand.u32 %s133, 1
        %s332 = scalar_lea.sflag [#allocation12], %s331
        %s333 = sand.u32 %s133, 1
        %s334 = smul.addr %s333, 16
        %s335 = scalar_lea.vmem [#allocation11], %s334
        %p336 = pneg %p146
        %p337 = pneg %p143
        %p338 = pneg %p167
        %p339 = pneg %p164
        %s340 = smul.u32 4, %s26
        %s341 = smul.u32 4, %s26
        %s342 = smul.u32 4, %s26
        %s343 = smul.u32 4, %s26
        %p344 = scmp.eq.s32.totalorder %s26, 0
        // Predicated region
        $region57: #{tpu_custom_call.1} parent=39 // pred_check
          %p345 = pneg %p344
        $region58: #{tpu_custom_call.1} parent=39 // pred_check_branch
          %347 = sbr.rel (%p345) target = $region60
        $region59: #{tpu_custom_call.1} parent=39 // pred_region
          %348 = vst [vmem:[#allocation2] sm:$0xf] 0.0
          %349 = vst [vmem:[#allocation2 + $0x4] sm:$0xf] 0.0
          %350 = vst [vmem:[#allocation2 + $0x8] sm:$0xf] 0.0
          %351 = vst [vmem:[#allocation3] sm:$0xf] 0.0
          %352 = vst [vmem:[#allocation3 + $0x4] sm:$0xf] 0.0
          %353 = vst [vmem:[#allocation3 + $0x8] sm:$0xf] 0.0
          %354 = vst [vmem:[#allocation4] sm:$0xf] 0.0
        $region60: #{tpu_custom_call.1} parent=39 // pred_fallthru
          _
        %v355 = vlaneseq
        %v356 = vand.u32 %v355, 127
        %s357 = smul.u32 %s26, 512
        %v358 = vstv %s357
        %v359 = vadd.s32 %v358, %v356
        %v360 = vld [vmem:[%s0] sm:$0xf]
        %361 = vset.pattern.permute.xlu0 0
        %362 = vperm.xlu0 %361, %v360
        %v363 = vpop.permute.xlu0 %362
        %v364 = vld [vmem:[#allocation2] sm:$0xf]
        %v365 = vld [vmem:[#allocation3] sm:$0xf]
        %s366 = scalar_lea.vmem [#allocation2], 4
        %v367 = vld [vmem:[%s366] sm:$0xf]
        %s368 = scalar_lea.vmem [#allocation3], 4
        %v369 = vld [vmem:[%s368] sm:$0xf]
        %s370 = scalar_lea.vmem [#allocation2], 8
        %v371 = vld [vmem:[%s370] sm:$0xf]
        %s372 = scalar_lea.vmem [#allocation3], 8
        %v373 = vld [vmem:[%s372] sm:$0xf]
        %v374 = vld [vmem:[#allocation4] sm:$0xf]
        %v375 = vstv 0
        %v376 = vadd.s32 %v359, %v375
        %vm377 = vcmp.lt.s32.totalorder %v376, %v363
        %v378 = vld [vmem:[%s303] sm:$0xf]
        %vm379 = vcmp.lt.s32.totalorder %v376, 1000
        %v380 = vsel %vm379, %v378, 0.0
        %v381 = vmul.f32 %v380, %v380
        %v382 = vadd.f32 %v374, %v381
        %v383 = vld [vmem:[%s276] sm:$0xf]
        %v384 = vsel %vm377, %v383, 0.0
        %v385 = vmul.f32 %v384, %v380
        %v386 = vadd.f32 %v364, %v385
        %v387 = vmul.f32 %v384, %v384
        %v388 = vadd.f32 %v365, %v387
        %v389 = vld [vmem:[%s285] sm:$0xf]
        %v390 = vsel %vm377, %v389, 0.0
        %v391 = vmul.f32 %v390, %v380
        %v392 = vadd.f32 %v367, %v391
        %v393 = vmul.f32 %v390, %v390
        %v394 = vadd.f32 %v369, %v393
        %v395 = vld [vmem:[%s294] sm:$0xf]
        %v396 = vsel %vm377, %v395, 0.0
        %v397 = vmul.f32 %v396, %v380
        %v398 = vadd.f32 %v371, %v397
        %v399 = vmul.f32 %v396, %v396
        %v400 = vadd.f32 %v373, %v399
        %v401 = vstv 128
        %v402 = vadd.s32 %v359, %v401
        %vm403 = vcmp.lt.s32.totalorder %v402, %v363
        %s404 = scalar_lea.vmem %s303, 4 [#allocation11]
        %v405 = vld [vmem:[%s404] sm:$0xf]
        %vm406 = vcmp.lt.s32.totalorder %v402, 1000
        %v407 = vsel %vm406, %v405, 0.0
        %v408 = vmul.f32 %v407, %v407
        %v409 = vadd.f32 %v382, %v408
        %s410 = scalar_lea.vmem %s276, 4 [#allocation5]
        %v411 = vld [vmem:[%s410] sm:$0xf]
        %v412 = vsel %vm403, %v411, 0.0
        %v413 = vmul.f32 %v412, %v407
        %v414 = vadd.f32 %v386, %v413
        %v415 = vmul.f32 %v412, %v412
        %v416 = vadd.f32 %v388, %v415
        %s417 = scalar_lea.vmem %s285, 4 [#allocation8]
        %v418 = vld [vmem:[%s417] sm:$0xf]
        %v419 = vsel %vm403, %v418, 0.0
        %v420 = vmul.f32 %v419, %v407
        %v421 = vadd.f32 %v392, %v420
        %v422 = vmul.f32 %v419, %v419
        %v423 = vadd.f32 %v394, %v422
        %s424 = scalar_lea.vmem %s294, 4 [#allocation10]
        %v425 = vld [vmem:[%s424] sm:$0xf]
        %v426 = vsel %vm403, %v425, 0.0
        %v427 = vmul.f32 %v426, %v407
        %v428 = vadd.f32 %v398, %v427
        %v429 = vmul.f32 %v426, %v426
        %v430 = vadd.f32 %v400, %v429
        %v431 = vstv 256
        %v432 = vadd.s32 %v359, %v431
        %vm433 = vcmp.lt.s32.totalorder %v432, %v363
        %s434 = scalar_lea.vmem %s303, 8 [#allocation11]
        %v435 = vld [vmem:[%s434] sm:$0xf]
        %vm436 = vcmp.lt.s32.totalorder %v432, 1000
        %v437 = vsel %vm436, %v435, 0.0
        %v438 = vmul.f32 %v437, %v437
        %v439 = vadd.f32 %v409, %v438
        %s440 = scalar_lea.vmem %s276, 8 [#allocation5]
        %v441 = vld [vmem:[%s440] sm:$0xf]
        %v442 = vsel %vm433, %v441, 0.0
        %v443 = vmul.f32 %v442, %v437
        %v444 = vadd.f32 %v414, %v443
        %v445 = vmul.f32 %v442, %v442
        %v446 = vadd.f32 %v416, %v445
        %s447 = scalar_lea.vmem %s285, 8 [#allocation8]
        %v448 = vld [vmem:[%s447] sm:$0xf]
        %v449 = vsel %vm433, %v448, 0.0
        %v450 = vmul.f32 %v449, %v437
        %v451 = vadd.f32 %v421, %v450
        %v452 = vmul.f32 %v449, %v449
        %v453 = vadd.f32 %v423, %v452
        %s454 = scalar_lea.vmem %s294, 8 [#allocation10]
        %v455 = vld [vmem:[%s454] sm:$0xf]
        %v456 = vsel %vm433, %v455, 0.0
        %v457 = vmul.f32 %v456, %v437
        %v458 = vadd.f32 %v428, %v457
        %v459 = vmul.f32 %v456, %v456
        %v460 = vadd.f32 %v430, %v459
        %v461 = vstv 384
        %v462 = vadd.s32 %v359, %v461
        %vm463 = vcmp.lt.s32.totalorder %v462, %v363
        %s464 = scalar_lea.vmem %s303, 12 [#allocation11]
        %v465 = vld [vmem:[%s464] sm:$0xf]
        %vm466 = vcmp.lt.s32.totalorder %v462, 1000
        %v467 = vsel %vm466, %v465, 0.0
        %v468 = vmul.f32 %v467, %v467
        %v469 = vadd.f32 %v439, %v468
        %s470 = scalar_lea.vmem %s276, 12 [#allocation5]
        %v471 = vld [vmem:[%s470] sm:$0xf]
        %v472 = vsel %vm463, %v471, 0.0
        %v473 = vmul.f32 %v472, %v467
        %v474 = vadd.f32 %v444, %v473
        %v475 = vmul.f32 %v472, %v472
        %v476 = vadd.f32 %v446, %v475
        %s477 = scalar_lea.vmem %s285, 12 [#allocation8]
        %v478 = vld [vmem:[%s477] sm:$0xf]
        %v479 = vsel %vm463, %v478, 0.0
        %v480 = vmul.f32 %v479, %v467
        %v481 = vadd.f32 %v451, %v480
        %v482 = vmul.f32 %v479, %v479
        %v483 = vadd.f32 %v453, %v482
        %s484 = scalar_lea.vmem %s294, 12 [#allocation10]
        %v485 = vld [vmem:[%s484] sm:$0xf]
        %v486 = vsel %vm463, %v485, 0.0
        %v487 = vmul.f32 %v486, %v467
        %v488 = vadd.f32 %v458, %v487
        %v489 = vmul.f32 %v486, %v486
        %v490 = vadd.f32 %v460, %v489
        %491 = vst [vmem:[#allocation2] sm:$0xf] %v474
        %492 = vst [vmem:[#allocation3] sm:$0xf] %v476
        %493 = vst [vmem:[%s366] sm:$0xf] %v481
        %494 = vst [vmem:[%s368] sm:$0xf] %v483
        %495 = vst [vmem:[%s370] sm:$0xf] %v488
        %496 = vst [vmem:[%s372] sm:$0xf] %v490
        %497 = vst [vmem:[#allocation4] sm:$0xf] %v469
        %p498 = scmp.eq.s32.totalorder %s26, 1
        // Predicated region
        $region61: #{tpu_custom_call.1} parent=39 // pred_check
          %p499 = pneg %p498
        $region62: #{tpu_custom_call.1} parent=39 // pred_check_branch
          %501 = sbr.rel (%p499) target = $region64
        $region63: #{tpu_custom_call.1} parent=39 // pred_region
          %v502 = vld [vmem:[#allocation4] sm:$0xf]
          %vm503 = vcmask 1043456
          %v504 = vsel %vm503, %v502, 0.0
          %505 = vadd.xlane.f32.xlu0 %v504
          %v506 = vpop.xlane.xlu0 %505
          %v507 = vld [vmem:[#allocation2] sm:$0xf]
          %v508 = vsel %vm503, %v507, 0.0
          %509 = vadd.xlane.f32.xlu0 %v508
          %v510 = vpop.xlane.xlu0 %509
          %v511 = vld [vmem:[#allocation3] sm:$0xf]
          %v512 = vsel %vm503, %v511, 0.0
          %513 = vadd.xlane.f32.xlu0 %v512
          %v514 = vpop.xlane.xlu0 %513
          %v515 = vadd.f32 %v510, 1e-06
          %v516 = vadd.f32 %v506, 1e-06
          %v517 = vrcp.pop %v516
          %v518 = vmul.f32 %v515, %v517
          %v519 = vmul.f32 %v518, %v506
          %v520 = vmul.f32 %v518, %v519
          %v521 = vadd.f32 %v520, 1e-06
          %v522 = vmul.f32 %v518, 2.0
          %v523 = vmul.f32 %v522, %v510
          %v524 = vsub.f32 %v520, %v523
          %v525 = vadd.f32 %v524, %v514
          %v526 = vadd.f32 %v525, 1e-06
          %v527 = vmax.f32 %v526, 1e-06
          %v528 = vrcp.pop %v527
          %v529 = vmul.f32 %v521, %v528
          %v530 = vlog2.pop %v529
          %v531 = vmul.f32 %v530, 0.6931472
          %v532 = vmul.f32 %v531, 0.4342945
          %v533 = vmul.f32 %v532, 20.0
          %vm534 = vcmask 3072
          %v535 = vsel %vm534, %v533, 0.0
          %536 = vadd.xlane.f32.xlu0 %v535
          %v537 = vpop.xlane.xlu0 %536
          %v538 = vrot.slane %v537, 4
          %v539 = vadd.f32 %v537, %v538
          %v540 = vrot.slane %v539, 2
          %v541 = vadd.f32 %v539, %v540
          %v542 = vrot.slane %v541, 1
          %v543 = vadd.f32 %v541, %v542
          %s544 = vtos %v543
          %s545 = smul.f32 %s544, 0.6
          %v546 = vld [vmem:[%s366] sm:$0xf]
          %v547 = vsel %vm503, %v546, 0.0
          %548 = vadd.xlane.f32.xlu0 %v547
          %v549 = vpop.xlane.xlu0 %548
          %v550 = vld [vmem:[%s368] sm:$0xf]
          %v551 = vsel %vm503, %v550, 0.0
          %552 = vadd.xlane.f32.xlu0 %v551
          %v553 = vpop.xlane.xlu0 %552
          %v554 = vadd.f32 %v549, 1e-06
          %v555 = vmul.f32 %v554, %v517
          %v556 = vmul.f32 %v555, %v506
          %v557 = vmul.f32 %v555, %v556
          %v558 = vadd.f32 %v557, 1e-06
          %v559 = vmul.f32 %v555, 2.0
          %v560 = vmul.f32 %v559, %v549
          %v561 = vsub.f32 %v557, %v560
          %v562 = vadd.f32 %v561, %v553
          %v563 = vadd.f32 %v562, 1e-06
          %v564 = vmax.f32 %v563, 1e-06
          %v565 = vrcp.pop %v564
          %v566 = vmul.f32 %v558, %v565
          %v567 = vlog2.pop %v566
          %v568 = vmul.f32 %v567, 0.6931472
          %v569 = vmul.f32 %v568, 0.4342945
          %v570 = vmul.f32 %v569, 20.0
          %v571 = vsel %vm534, %v570, 0.0
          %572 = vadd.xlane.f32.xlu0 %v571
          %v573 = vpop.xlane.xlu0 %572
          %v574 = vrot.slane %v573, 4
          %v575 = vadd.f32 %v573, %v574
          %v576 = vrot.slane %v575, 2
          %v577 = vadd.f32 %v575, %v576
          %v578 = vrot.slane %v577, 1
          %v579 = vadd.f32 %v577, %v578
          %s580 = vtos %v579
          %s581 = smul.f32 %s580, 0.2
          %s582 = sadd.f32 %s545, %s581
          %v583 = vld [vmem:[%s370] sm:$0xf]
          %v584 = vsel %vm503, %v583, 0.0
          %585 = vadd.xlane.f32.xlu0 %v584
          %v586 = vpop.xlane.xlu0 %585
          %v587 = vld [vmem:[%s372] sm:$0xf]
          %v588 = vsel %vm503, %v587, 0.0
          %589 = vadd.xlane.f32.xlu0 %v588
          %v590 = vpop.xlane.xlu0 %589
          %v591 = vadd.f32 %v586, 1e-06
          %v592 = vmul.f32 %v591, %v517
          %v593 = vmul.f32 %v592, %v506
          %v594 = vmul.f32 %v592, %v593
          %v595 = vadd.f32 %v594, 1e-06
          %v596 = vmul.f32 %v592, 2.0
          %v597 = vmul.f32 %v596, %v586
          %v598 = vsub.f32 %v594, %v597
          %v599 = vadd.f32 %v598, %v590
          %v600 = vadd.f32 %v599, 1e-06
          %v601 = vmax.f32 %v600, 1e-06
          %v602 = vrcp.pop %v601
          %v603 = vmul.f32 %v595, %v602
          %v604 = vlog2.pop %v603
          %v605 = vmul.f32 %v604, 0.6931472
          %v606 = vmul.f32 %v605, 0.4342945
          %v607 = vmul.f32 %v606, 20.0
          %v608 = vsel %vm534, %v607, 0.0
          %609 = vadd.xlane.f32.xlu0 %v608
          %v610 = vpop.xlane.xlu0 %609
          %v611 = vrot.slane %v610, 4
          %v612 = vadd.f32 %v610, %v611
          %v613 = vrot.slane %v612, 2
          %v614 = vadd.f32 %v612, %v613
          %v615 = vrot.slane %v614, 1
          %v616 = vadd.f32 %v614, %v615
          %s617 = vtos %v616
          %s618 = smul.f32 %s617, 0.2
          %s619 = sadd.f32 %s582, %s618
          %s620 = ssub.f32 0.0, %s619
          %v621 = vrcp.pop 4.0
          %s622 = vtos %v621
          %s623 = smul.f32 %s620, %s622
          %s624 = scalar_lea.smem [#allocation13], 0
          %625 = sst [smem:[%s624]] %s623
        $region64: #{tpu_custom_call.1} parent=39 // pred_fallthru
          _
        // Predicated region
        $region65: #{tpu_custom_call.1} parent=39 // pred_check
          %p626 = pneg %p164
        $region66: #{tpu_custom_call.1} parent=39 // pred_check_branch
          %628 = sbr.rel (%p626) target = $region68
        $region67: #{tpu_custom_call.1} parent=39 // pred_region
          %s630 = ssub.s32 16, 16
          %631 = vsyncadd [#allocation7], %s630
          %634 = dma.smem_to_hbm [#allocation13], 16, %s5, [#allocation7]
        $region68: #{tpu_custom_call.1} parent=39 // pred_fallthru
          _
        // Predicated region
        $region69: #{tpu_custom_call.1} parent=39 // pred_check
          %p635 = pneg %p164
        $region70: #{tpu_custom_call.1} parent=39 // pred_check_branch
          %637 = sbr.rel (%p635) target = $region72
        $region71: #{tpu_custom_call.1} parent=39 // pred_region
          %638 = dma.done [#allocation7], 16
        $region72: #{tpu_custom_call.1} parent=39 // pred_fallthru
          _
        %639 = sfence
      $region40: #{tpu_custom_call.1} parent=5 // pred_fallthru
        _
      %p640 = scmp.le.s32.totalorder 2, %s21
      // Predicated region
      $region73: #{tpu_custom_call.1} parent=5 // pred_check
        %p641 = pneg %p640
      $region74: #{tpu_custom_call.1} parent=5 // pred_check_branch
        %643 = sbr.rel (%p641) target = $region76
      $region75: #{tpu_custom_call.1} parent=5 // pred_region
        %s644 = ssub.s32 %s21, 2
      $region76: #{tpu_custom_call.1} parent=5 // pred_fallthru
        _
    $region6: #{tpu_custom_call.1} parent=1 // loop_footer
      %s25 = sadd.s32 1, %s21
    $region7: #{tpu_custom_call.1} parent=1 // loop_footer_branch
      %20 = sbr.rel target = $region3
    $region8: #{tpu_custom_call.1} parent=1 // loop_exit
      _
    %645 = vsyncpa [#allocation6], 1
    %s646 = scalar_lea.sflag [#allocation6], 1
    %647 = vsyncpa %s646, 1
    %648 = vsyncpa [#allocation9], 1
    %s649 = scalar_lea.sflag [#allocation9], 1
    %650 = vsyncpa %s649, 1
    %651 = vsyncpa [#allocation12], 1
    %s652 = scalar_lea.sflag [#allocation12], 1
    %653 = vsyncpa %s652, 1
    %654 = vsyncpa [#allocation7], 1
    %s655 = scalar_lea.sflag [#allocation7], 1
    %656 = vsyncpa %s655, 1

</llo_original>
